<compile_context>
chip_gen: v7x
topology: tpu7x:2x2x1
jax: 0.10.0
libtpu: 0.0.40
codegen_flags: <defaults>
</compile_context>

<pallas_src>
import jax
import jax.numpy as jnp
from jax.experimental import pallas as pl
from jax.experimental.pallas import tpu as pltpu


def _round_up(x, m):
    return ((x + m - 1) // m) * m


def _vmem_estimate(tile_b, in_pad, hid_pad, c_pad):
    # Per-grid-step VMEM residency (one branch live at a time):
    #   bf16 W1/W2 (double-buffered), f32 biases (sublane-padded to 8 rows,
    #   double-buffered), bf16 x tile + f32 out tile (double-buffered),
    #   f32 hidden intermediate (+ its bf16 copy for the second matmul).
    w = 2 * 2 * (in_pad * hid_pad + hid_pad * c_pad)
    b = 2 * 4 * 8 * (hid_pad + c_pad)
    x = 2 * 2 * tile_b * in_pad
    o = 2 * 4 * tile_b * c_pad
    h = tile_b * hid_pad * (4 + 2)
    return w + b + x + o + h


def _pick_tile_b(batch, in_pad, hid_pad, c_pad, budget=32 * 1024 * 1024):
    tile = 8
    for cand in (1024, 512, 256, 128, 64, 32, 16, 8):
        if _vmem_estimate(cand, in_pad, hid_pad, c_pad) <= budget:
            tile = cand
            break
    # Small batches: one full-array block (always layout-legal).
    tile_b = batch if batch <= tile else tile
    return tile_b, _vmem_estimate(tile_b, in_pad, hid_pad, c_pad)


def prepare_ecg_text_params(ecg_params, text_params):
    """One-time parameter preparation (call once, outside the per-step
    forward): zero-pads every dim to a multiple of 128 lanes, casts weights to
    bf16 (biases stay f32 for the f32 bias-add), and stacks the two branches
    along a leading axis so a single pallas_call grid axis selects the branch."""

    def pad2(a, rows, cols):
        out = jnp.zeros((rows, cols), a.dtype)
        return out.at[: a.shape[0], : a.shape[1]].set(a)

    ew1, eb1, ew2, eb2 = ecg_params
    tw1, tb1, tw2, tb2 = text_params
    in_dim, hid = ew1.shape
    num_classes = ew2.shape[1]
    in_pad = _round_up(in_dim, 128)
    hid_pad = _round_up(hid, 128)
    c_pad = _round_up(num_classes, 128)

    w1s = jnp.stack([pad2(ew1, in_pad, hid_pad),
                     pad2(tw1, in_pad, hid_pad)]).astype(jnp.bfloat16)
    b1s = jnp.stack([pad2(eb1, 1, hid_pad),
                     pad2(tb1, 1, hid_pad)]).astype(jnp.float32)
    w2s = jnp.stack([pad2(ew2, hid_pad, c_pad),
                     pad2(tw2, hid_pad, c_pad)]).astype(jnp.bfloat16)
    b2s = jnp.stack([pad2(eb2, 1, c_pad),
                     pad2(tb2, 1, c_pad)]).astype(jnp.float32)
    return (w1s, b1s, w2s, b2s)


def _branch_mlp_kernel(x_ref, w1_ref, b1_ref, w2_ref, b2_ref, o_ref):
    """relu(x @ W1 + b1) @ W2 + b2 for the branch selected by grid axis 0."""
    h = jnp.dot(x_ref[...], w1_ref[...],
                preferred_element_type=jnp.float32)      # bf16 MXU, f32 accum
    h = jnp.maximum(h + b1_ref[...], 0.0)                # f32 bias add / ReLU
    o = jnp.dot(h.astype(w2_ref.dtype), w2_ref[...],
                preferred_element_type=jnp.float32) + b2_ref[...]
    o_ref[...] = o.astype(o_ref.dtype)                   # dense 128-lane store


def ecg_text_mlp_forward(ecg_input, text_input, prepared_params, *, num_classes):
    """ECGTextMLP.forward: one fused pallas_call, returns (ecg_out, text_out)."""
    w1s, b1s, w2s, b2s = prepared_params
    B, in_dim = ecg_input.shape
    _, in_pad, hid_pad = w1s.shape
    c_pad = w2s.shape[2]

    # Per-call activation prep only: pad in_dim to the lane-dense width and
    # cast to bf16, then stack the two branches along the grid's branch axis.
    def prep_x(x):
        if in_pad != in_dim:
            x = jnp.pad(x, ((0, 0), (0, in_pad - in_dim)))
        return x.astype(jnp.bfloat16)

    x_stack = jnp.stack([prep_x(ecg_input), prep_x(text_input)], axis=0)

    tile_b, vmem_est = _pick_tile_b(B, in_pad, hid_pad, c_pad)
    grid = (2, pl.cdiv(B, tile_b))   # (branch, batch tiles), both parallel

    # Branch dim is squeezed (None); weights are VMEM-resident across batch
    # tiles (index_map constant in the batch axis).
    x_spec = pl.BlockSpec((None, tile_b, in_pad), lambda br, i: (br, i, 0))
    w1_spec = pl.BlockSpec((None, in_pad, hid_pad), lambda br, i: (br, 0, 0))
    b1_spec = pl.BlockSpec((None, 1, hid_pad), lambda br, i: (br, 0, 0))
    w2_spec = pl.BlockSpec((None, hid_pad, c_pad), lambda br, i: (br, 0, 0))
    b2_spec = pl.BlockSpec((None, 1, c_pad), lambda br, i: (br, 0, 0))
    out_spec = pl.BlockSpec((None, tile_b, c_pad), lambda br, i: (br, i, 0))

    flops = 2 * 2 * B * (in_pad * hid_pad + hid_pad * c_pad)
    bytes_in = (int(x_stack.size) * 2 + int(w1s.size) * 2 + int(w2s.size) * 2
                + int(b1s.size) * 4 + int(b2s.size) * 4)
    bytes_out = 2 * B * c_pad * 4
    cost = pl.CostEstimate(flops=flops, transcendentals=0,
                           bytes_accessed=bytes_in + bytes_out)

    vmem_limit = int(min(max(2 * vmem_est, 32 * 1024 * 1024), 48 * 1024 * 1024))

    out = pl.pallas_call(
        _branch_mlp_kernel,
        out_shape=jax.ShapeDtypeStruct((2, B, c_pad), jnp.float32),
        grid=grid,
        in_specs=[x_spec, w1_spec, b1_spec, w2_spec, b2_spec],
        out_specs=out_spec,
        compiler_params=pltpu.CompilerParams(
            dimension_semantics=("parallel", "parallel"),
            vmem_limit_bytes=vmem_limit),
        cost_estimate=cost,
    )(x_stack, w1s, b1s, w2s, b2s)

    # Slice the 128-padded logits back to num_classes (kept for exact module
    # semantics; consumers tolerating padded logits can skip this copy).
    return out[0, :, :num_classes], out[1, :, :num_classes]


def init_mlp_params(key, input_dim, hidden_dim, num_classes, dtype=jnp.float32):
    """Deterministic synthetic parameters for one MLP branch (shapes match
    nn.Linear(input_dim, hidden_dim) and nn.Linear(hidden_dim, num_classes),
    stored transposed as (in, out))."""
    k1, k2, k3, k4 = jax.random.split(key, 4)
    w1 = jax.random.normal(k1, (input_dim, hidden_dim), dtype) * 0.1
    b1 = jax.random.normal(k2, (1, hidden_dim), dtype) * 0.1
    w2 = jax.random.normal(k3, (hidden_dim, num_classes), dtype) * 0.1
    b2 = jax.random.normal(k4, (1, num_classes), dtype) * 0.1
    return w1, b1, w2, b2


def _reference_f32(x, params):
    w1, b1, w2, b2 = params
    h = jnp.maximum(x @ w1 + b1, 0.0)
    return h @ w2 + b2


def _reference_bf16(x, params):
    # Same numerics as the kernel: bf16 matmul inputs, f32 accumulation,
    # f32 bias add / ReLU.
    w1, b1, w2, b2 = params
    h = jnp.dot(x.astype(jnp.bfloat16), w1.astype(jnp.bfloat16),
                preferred_element_type=jnp.float32) + b1
    h = jnp.maximum(h, 0.0)
    return jnp.dot(h.astype(jnp.bfloat16), w2.astype(jnp.bfloat16),
                   preferred_element_type=jnp.float32) + b2


if __name__ == "__main__":
    # Small shapes consistent with the module's forward:
    # batch=2, input_dim=16, hidden_dim=32, num_classes=8
    batch, input_dim, hidden_dim, num_classes = 2, 16, 32, 8

    key = jax.random.PRNGKey(0)
    k_ecg_in, k_txt_in, k_ecg_p, k_txt_p = jax.random.split(key, 4)

    ecg_input = jax.random.normal(k_ecg_in, (batch, input_dim), jnp.float32)
    text_input = jax.random.normal(k_txt_in, (batch, input_dim), jnp.float32)

    ecg_params = init_mlp_params(k_ecg_p, input_dim, hidden_dim, num_classes)
    text_params = init_mlp_params(k_txt_p, input_dim, hidden_dim, num_classes)

    # One-time parameter prep (padding / bf16 cast / branch stacking) --
    # intentionally outside the jitted per-step forward.
    prepared = jax.block_until_ready(
        prepare_ecg_text_params(ecg_params, text_params))

    fwd = jax.jit(ecg_text_mlp_forward, static_argnames=("num_classes",))
    ecg_out, text_out = fwd(ecg_input, text_input, prepared,
                            num_classes=num_classes)
    jax.block_until_ready((ecg_out, text_out))

    assert ecg_out.shape == (batch, num_classes)
    assert text_out.shape == (batch, num_classes)

    # Tight check vs. a bf16-matmul / f32-accum reference (kernel numerics),
    # looser check vs. the pure-f32 reference (module semantics).
    ref_ecg_bf16 = _reference_bf16(ecg_input, ecg_params)
    ref_txt_bf16 = _reference_bf16(text_input, text_params)
    ref_ecg_f32 = _reference_f32(ecg_input, ecg_params)
    ref_txt_f32 = _reference_f32(text_input, text_params)
    assert jnp.allclose(ecg_out, ref_ecg_bf16, atol=2e-3, rtol=2e-3)
    assert jnp.allclose(text_out, ref_txt_bf16, atol=2e-3, rtol=2e-3)
    assert jnp.allclose(ecg_out, ref_ecg_f32, atol=3e-2, rtol=3e-2)
    assert jnp.allclose(text_out, ref_txt_f32, atol=3e-2, rtol=3e-2)

    print("KERNEL_OK")
</pallas_src>

<mosaic_0001>
module attributes {stable_mosaic.version = 11 : i64} {
  func.func @_branch_mlp_kernel(%arg0: i32, %arg1: i32, %arg2: memref<1x2x128xbf16, #tpu.memory_space<vmem>>, %arg3: memref<1x128x128xbf16, #tpu.memory_space<vmem>>, %arg4: memref<1x1x128xf32, #tpu.memory_space<vmem>>, %arg5: memref<1x128x128xbf16, #tpu.memory_space<vmem>>, %arg6: memref<1x1x128xf32, #tpu.memory_space<vmem>>, %arg7: memref<1x2x128xf32, #tpu.memory_space<vmem>>) attributes {dimension_semantics = [#tpu.dimension_semantics<parallel>, #tpu.dimension_semantics<parallel>], iteration_bounds = array<i64: 2, 1>, scalar_prefetch = 0 : i64, scratch_operands = 0 : i64, tpu.core_type = #tpu.core_type<tc>, window_params = [{transform_indices = @transform_0, window_bounds = array<i64: 1, 2, 128>}, {transform_indices = @transform_1, window_bounds = array<i64: 1, 128, 128>}, {transform_indices = @transform_2, window_bounds = array<i64: 1, 1, 128>}, {transform_indices = @transform_3, window_bounds = array<i64: 1, 128, 128>}, {transform_indices = @transform_4, window_bounds = array<i64: 1, 1, 128>}, {transform_indices = @transform_5, window_bounds = array<i64: 1, 2, 128>}]} {
    %c0 = arith.constant 0 : index
    %c0_0 = arith.constant 0 : index
    %c0_1 = arith.constant 0 : index
    %0 = vector.load %arg2[%c0, %c0_0, %c0_1] : memref<1x2x128xbf16, #tpu.memory_space<vmem>>, vector<1x2x128xbf16>
    %1 = vector.shape_cast %0 : vector<1x2x128xbf16> to vector<2x128xbf16>
    %c0_2 = arith.constant 0 : index
    %c0_3 = arith.constant 0 : index
    %c0_4 = arith.constant 0 : index
    %2 = vector.load %arg3[%c0_2, %c0_3, %c0_4] : memref<1x128x128xbf16, #tpu.memory_space<vmem>>, vector<1x128x128xbf16>
    %3 = vector.shape_cast %2 : vector<1x128x128xbf16> to vector<128x128xbf16>
    %cst = arith.constant dense<0.000000e+00> : vector<2x128xf32>
    %4 = tpu.matmul %1, %3, %cst {dimension_numbers = #tpu.dot_dimension_numbers<[1], [0], [0], [1], [0, 0, 1, 1], [], []>} : vector<2x128xbf16>, vector<128x128xbf16>, vector<2x128xf32> -> vector<2x128xf32>
    %c0_5 = arith.constant 0 : index
    %c0_6 = arith.constant 0 : index
    %c0_7 = arith.constant 0 : index
    %5 = vector.load %arg4[%c0_5, %c0_6, %c0_7] : memref<1x1x128xf32, #tpu.memory_space<vmem>>, vector<1x1x128xf32>
    %6 = vector.shape_cast %5 : vector<1x1x128xf32> to vector<1x128xf32>
    %7 = vector.broadcast %6 : vector<1x128xf32> to vector<2x128xf32>
    %8 = arith.addf %4, %7 : vector<2x128xf32>
    %cst_8 = arith.constant 0.000000e+00 : f32
    %9 = vector.broadcast %cst_8 : f32 to vector<2x128xf32>
    %10 = arith.maximumf %8, %9 : vector<2x128xf32>
    %11 = arith.truncf %10 : vector<2x128xf32> to vector<2x128xbf16>
    %c0_9 = arith.constant 0 : index
    %c0_10 = arith.constant 0 : index
    %c0_11 = arith.constant 0 : index
    %12 = vector.load %arg5[%c0_9, %c0_10, %c0_11] : memref<1x128x128xbf16, #tpu.memory_space<vmem>>, vector<1x128x128xbf16>
    %13 = vector.shape_cast %12 : vector<1x128x128xbf16> to vector<128x128xbf16>
    %cst_12 = arith.constant dense<0.000000e+00> : vector<2x128xf32>
    %14 = tpu.matmul %11, %13, %cst_12 {dimension_numbers = #tpu.dot_dimension_numbers<[1], [0], [0], [1], [0, 0, 1, 1], [], []>} : vector<2x128xbf16>, vector<128x128xbf16>, vector<2x128xf32> -> vector<2x128xf32>
    %c0_13 = arith.constant 0 : index
    %c0_14 = arith.constant 0 : index
    %c0_15 = arith.constant 0 : index
    %15 = vector.load %arg6[%c0_13, %c0_14, %c0_15] : memref<1x1x128xf32, #tpu.memory_space<vmem>>, vector<1x1x128xf32>
    %16 = vector.shape_cast %15 : vector<1x1x128xf32> to vector<1x128xf32>
    %17 = vector.broadcast %16 : vector<1x128xf32> to vector<2x128xf32>
    %18 = arith.addf %14, %17 : vector<2x128xf32>
    %c0_16 = arith.constant 0 : index
    %c0_17 = arith.constant 0 : index
    %c0_18 = arith.constant 0 : index
    %19 = vector.load %arg7[%c0_16, %c0_17, %c0_18] : memref<1x2x128xf32, #tpu.memory_space<vmem>>, vector<1x2x128xf32>
    %20 = vector.shape_cast %19 : vector<1x2x128xf32> to vector<2x128xf32>
    %21 = vector.shape_cast %18 : vector<2x128xf32> to vector<1x2x128xf32>
    tpu.vector_store %arg7[%c0_16, %c0_17, %c0_18], %21 {strides = array<i32>} : memref<1x2x128xf32, #tpu.memory_space<vmem>>, vector<1x2x128xf32>,
    return
  }
  func.func @transform_0(%arg0: i32, %arg1: i32) -> (i32, i32, i32) {
    %c0_i32 = arith.constant 0 : i32
    %c0_i32_0 = arith.constant 0 : i32
    return %arg0, %arg1, %c0_i32 : i32, i32, i32
  }
  func.func @transform_1(%arg0: i32, %arg1: i32) -> (i32, i32, i32) {
    %c0_i32 = arith.constant 0 : i32
    %c0_i32_0 = arith.constant 0 : i32
    %c0_i32_1 = arith.constant 0 : i32
    return %arg0, %c0_i32, %c0_i32_0 : i32, i32, i32
  }
  func.func @transform_2(%arg0: i32, %arg1: i32) -> (i32, i32, i32) {
    %c0_i32 = arith.constant 0 : i32
    %c0_i32_0 = arith.constant 0 : i32
    %c0_i32_1 = arith.constant 0 : i32
    return %arg0, %c0_i32, %c0_i32_0 : i32, i32, i32
  }
  func.func @transform_3(%arg0: i32, %arg1: i32) -> (i32, i32, i32) {
    %c0_i32 = arith.constant 0 : i32
    %c0_i32_0 = arith.constant 0 : i32
    %c0_i32_1 = arith.constant 0 : i32
    return %arg0, %c0_i32, %c0_i32_0 : i32, i32, i32
  }
  func.func @transform_4(%arg0: i32, %arg1: i32) -> (i32, i32, i32) {
    %c0_i32 = arith.constant 0 : i32
    %c0_i32_0 = arith.constant 0 : i32
    %c0_i32_1 = arith.constant 0 : i32
    return %arg0, %c0_i32, %c0_i32_0 : i32, i32, i32
  }
  func.func @transform_5(%arg0: i32, %arg1: i32) -> (i32, i32, i32) {
    %c0_i32 = arith.constant 0 : i32
    %c0_i32_0 = arith.constant 0 : i32
    return %arg0, %arg1, %c0_i32 : i32, i32, i32
  }
}

</mosaic_0001>

<llo_original>
// kernel: ecg_text_mlp_forward.1
$region0: #{ecg_text_mlp_forward.1}
  #allocation0 [shape = 'u32[]', space=smem, size = 0x4, offset = 0x4, fixed_abs, tag = 'smem constant byte address 0x4 - core index']
  #allocation1 [shape = 'u32[144,128]{1,0:T(1,128)}', space=vmem, size = 0x12000, scoped, tag = 'internal scratch']
  %s0 = inlined_call_operand.vmem [shape: bf16[2,2,128], index: 0, kind: input, shape index: {}]
  %s1 = inlined_call_operand.hbm [shape: bf16[2,128,128], index: 1, kind: input, shape index: {}]
  %s2 = inlined_call_operand.vmem [shape: f32[2,1,128], index: 2, kind: input, shape index: {}]
  %s3 = inlined_call_operand.hbm [shape: bf16[2,128,128], index: 3, kind: input, shape index: {}]
  %s4 = inlined_call_operand.vmem [shape: f32[2,1,128], index: 4, kind: input, shape index: {}]
  %s5 = inlined_call_operand.vmem [shape: f32[2,2,128], index: 5, kind: output, shape index: {}]
  %s6 = sld [smem:[#allocation0]]
  $region61: #{ecg_text_mlp_forward.1} parent=0
    _
  %s8 = ssub.s32 1, %s6
  %s9 = scalar_select 0, %s8, %s6
  $region1: #{ecg_text_mlp_forward.1} parent=0
    #allocation2 [shape = 'u8[65536]{0}', space=vmem, size = 0x10000, scoped, tag = 'input window, operand 1']
    #allocation3 [shape = 's32[2]{0}', space=sflag, size = 0x8, scoped, tag = 'scoped memory for ecg_text_mlp_forward.1']
    #allocation4 [shape = 'u8[65536]{0}', space=vmem, size = 0x10000, scoped, tag = 'input window, operand 3']
    #allocation5 [shape = 's32[2]{0}', space=sflag, size = 0x8, scoped, tag = 'scoped memory for ecg_text_mlp_forward.1']
    %10 = vsyncpa [#allocation3], 0
    %s11 = scalar_lea.sflag [#allocation3], 1
    %12 = vsyncpa %s11, 0
    %13 = vsyncpa [#allocation5], 0
    %s14 = scalar_lea.sflag [#allocation5], 1
    %15 = vsyncpa %s14, 0
    loop: start=0, step=1, limit=4
    $region2: #{ecg_text_mlp_forward.1} parent=1 // loop_pre_header
      _
    $region3: #{ecg_text_mlp_forward.1} parent=1 // loop_header
      %s17 = sphi 0, %s21
      %p18 = scmp.ge.s32.totalorder %s17, 4
      %s24 = sphi 0, %s36
      %s25 = sphi 0, %s32
      %s26 = sphi 0, %s24
      %s27 = sphi 0, %s25
      %s28 = sphi 0, %s26
      %s29 = sphi 0, %s27
      %s41 = sphi 0, %s43
      %s44 = sphi 0, %s41
      %s45 = sphi 0, %s44
      %s61 = sphi 0, %s45
      %s67 = sphi 0, %s69
      %s70 = sphi 0, %s67
      %s71 = sphi 0, %s70
      %s87 = sphi 0, %s71
      %s93 = sphi 0, %s95
      %s96 = sphi 0, %s93
      %s97 = sphi 0, %s96
      %s113 = sphi 0, %s97
      %s119 = sphi 0, %s121
      %s122 = sphi 0, %s119
      %s123 = sphi 0, %s122
      %s139 = sphi 0, %s123
      %s145 = sphi 0, %s147
      %s148 = sphi 0, %s145
      %s149 = sphi 0, %s148
      %s165 = sphi 0, %s149
      %s173 = sphi 0, %s175
      %s176 = sphi 0, %s173
      %s177 = sphi 0, %s176
      %s193 = sphi 0, %s177
    $region4: #{ecg_text_mlp_forward.1} parent=1 // loop_header_branch
      %20 = sbr.rel (%p18) target = $region8
    $region5: #{ecg_text_mlp_forward.1} parent=1 // loop_body
      %s22 = ssub.s32 %s17, 1
      %s23 = ssub.s32 %s17, 2
      %s30 = sadd.s32 1, %s25
      %p31 = scmp.ge.s32.totalorder %s30, 1
      %s32 = scalar_select %p31, 0, %s30
      %s33 = sadd.s32 1, %s24
      %s34 = scalar_select %p31, %s33, %s24
      %p35 = scmp.ge.s32.totalorder %s34, 2
      %s36 = scalar_select %p35, 0, %s34
      %s37 = ssub.s32 %s24, %s36
      %s38 = ssub.s32 %s25, %s32
      %s39 = sor.u32 %s37, %s38
      %p40 = scmp.eq.s32.totalorder %s39, 0
      %s42 = sadd.s32 %s41, 1
      %s43 = scalar_select %p40, %s41, %s42
      %p46 = pneg %p40
      %p47 = scmp.eq.s32.totalorder %s17, 1
      %p48 = por %p46, %p47
      %p49 = scmp.ne.s32.totalorder %s41, %s44
      %p50 = scmp.eq.s32.totalorder %s17, 0
      %p51 = por %p49, %p50
      %p52 = scmp.ne.s32.totalorder %s41, %s44
      %p53 = scmp.eq.s32.totalorder %s22, 1
      %p54 = por %p52, %p53
      %p55 = scmp.ne.s32.totalorder %s44, %s45
      %p56 = scmp.eq.s32.totalorder %s22, 0
      %p57 = por %p55, %p56
      %p58 = scmp.ne.s32.totalorder %s44, %s45
      %p59 = scmp.eq.s32.totalorder %s23, 1
      %p60 = por %p58, %p59
      %p62 = scmp.ne.s32.totalorder %s45, %s61
      %p63 = scmp.eq.s32.totalorder %s23, 0
      %p64 = por %p62, %p63
      %s65 = ssub.s32 %s24, %s36
      %p66 = scmp.eq.s32.totalorder %s65, 0
      %s68 = sadd.s32 %s67, 1
      %s69 = scalar_select %p66, %s67, %s68
      %p72 = pneg %p66
      %p73 = scmp.eq.s32.totalorder %s17, 1
      %p74 = por %p72, %p73
      %p75 = scmp.ne.s32.totalorder %s67, %s70
      %p76 = scmp.eq.s32.totalorder %s17, 0
      %p77 = por %p75, %p76
      %p78 = scmp.ne.s32.totalorder %s67, %s70
      %p79 = scmp.eq.s32.totalorder %s22, 1
      %p80 = por %p78, %p79
      %p81 = scmp.ne.s32.totalorder %s70, %s71
      %p82 = scmp.eq.s32.totalorder %s22, 0
      %p83 = por %p81, %p82
      %p84 = scmp.ne.s32.totalorder %s70, %s71
      %p85 = scmp.eq.s32.totalorder %s23, 1
      %p86 = por %p84, %p85
      %p88 = scmp.ne.s32.totalorder %s71, %s87
      %p89 = scmp.eq.s32.totalorder %s23, 0
      %p90 = por %p88, %p89
      %s91 = ssub.s32 %s24, %s36
      %p92 = scmp.eq.s32.totalorder %s91, 0
      %s94 = sadd.s32 %s93, 1
      %s95 = scalar_select %p92, %s93, %s94
      %p98 = pneg %p92
      %p99 = scmp.eq.s32.totalorder %s17, 1
      %p100 = por %p98, %p99
      %p101 = scmp.ne.s32.totalorder %s93, %s96
      %p102 = scmp.eq.s32.totalorder %s17, 0
      %p103 = por %p101, %p102
      %p104 = scmp.ne.s32.totalorder %s93, %s96
      %p105 = scmp.eq.s32.totalorder %s22, 1
      %p106 = por %p104, %p105
      %p107 = scmp.ne.s32.totalorder %s96, %s97
      %p108 = scmp.eq.s32.totalorder %s22, 0
      %p109 = por %p107, %p108
      %p110 = scmp.ne.s32.totalorder %s96, %s97
      %p111 = scmp.eq.s32.totalorder %s23, 1
      %p112 = por %p110, %p111
      %p114 = scmp.ne.s32.totalorder %s97, %s113
      %p115 = scmp.eq.s32.totalorder %s23, 0
      %p116 = por %p114, %p115
      %s117 = ssub.s32 %s24, %s36
      %p118 = scmp.eq.s32.totalorder %s117, 0
      %s120 = sadd.s32 %s119, 1
      %s121 = scalar_select %p118, %s119, %s120
      %p124 = pneg %p118
      %p125 = scmp.eq.s32.totalorder %s17, 1
      %p126 = por %p124, %p125
      %p127 = scmp.ne.s32.totalorder %s119, %s122
      %p128 = scmp.eq.s32.totalorder %s17, 0
      %p129 = por %p127, %p128
      %p130 = scmp.ne.s32.totalorder %s119, %s122
      %p131 = scmp.eq.s32.totalorder %s22, 1
      %p132 = por %p130, %p131
      %p133 = scmp.ne.s32.totalorder %s122, %s123
      %p134 = scmp.eq.s32.totalorder %s22, 0
      %p135 = por %p133, %p134
      %p136 = scmp.ne.s32.totalorder %s122, %s123
      %p137 = scmp.eq.s32.totalorder %s23, 1
      %p138 = por %p136, %p137
      %p140 = scmp.ne.s32.totalorder %s123, %s139
      %p141 = scmp.eq.s32.totalorder %s23, 0
      %p142 = por %p140, %p141
      %s143 = ssub.s32 %s24, %s36
      %p144 = scmp.eq.s32.totalorder %s143, 0
      %s146 = sadd.s32 %s145, 1
      %s147 = scalar_select %p144, %s145, %s146
      %p150 = pneg %p144
      %p151 = scmp.eq.s32.totalorder %s17, 1
      %p152 = por %p150, %p151
      %p153 = scmp.ne.s32.totalorder %s145, %s148
      %p154 = scmp.eq.s32.totalorder %s17, 0
      %p155 = por %p153, %p154
      %p156 = scmp.ne.s32.totalorder %s145, %s148
      %p157 = scmp.eq.s32.totalorder %s22, 1
      %p158 = por %p156, %p157
      %p159 = scmp.ne.s32.totalorder %s148, %s149
      %p160 = scmp.eq.s32.totalorder %s22, 0
      %p161 = por %p159, %p160
      %p162 = scmp.ne.s32.totalorder %s148, %s149
      %p163 = scmp.eq.s32.totalorder %s23, 1
      %p164 = por %p162, %p163
      %p166 = scmp.ne.s32.totalorder %s149, %s165
      %p167 = scmp.eq.s32.totalorder %s23, 0
      %p168 = por %p166, %p167
      %s169 = ssub.s32 %s24, %s36
      %s170 = ssub.s32 %s25, %s32
      %s171 = sor.u32 %s169, %s170
      %p172 = scmp.eq.s32.totalorder %s171, 0
      %s174 = sadd.s32 %s173, 1
      %s175 = scalar_select %p172, %s173, %s174
      %p178 = pneg %p172
      %p179 = scmp.eq.s32.totalorder %s17, 1
      %p180 = por %p178, %p179
      %p181 = scmp.ne.s32.totalorder %s173, %s176
      %p182 = scmp.eq.s32.totalorder %s17, 0
      %p183 = por %p181, %p182
      %p184 = scmp.ne.s32.totalorder %s173, %s176
      %p185 = scmp.eq.s32.totalorder %s22, 1
      %p186 = por %p184, %p185
      %p187 = scmp.ne.s32.totalorder %s176, %s177
      %p188 = scmp.eq.s32.totalorder %s22, 0
      %p189 = por %p187, %p188
      %p190 = scmp.ne.s32.totalorder %s176, %s177
      %p191 = scmp.eq.s32.totalorder %s23, 1
      %p192 = por %p190, %p191
      %p194 = scmp.ne.s32.totalorder %s177, %s193
      %p195 = scmp.eq.s32.totalorder %s23, 0
      %p196 = por %p194, %p195
      %p197 = scmp.le.s32.totalorder 1, %s17
      %p198 = scmp.lt.s32.totalorder %s17, 3
      %p199 = pnand %p197, %p198
      %p200 = pneg %p199
      // Predicated region
      $region9: #{ecg_text_mlp_forward.1} parent=5 // pred_check
        _
      $region10: #{ecg_text_mlp_forward.1} parent=5 // pred_check_branch
        %202 = sbr.rel (%p199) target = $region12
      $region11: #{ecg_text_mlp_forward.1} parent=5 // pred_region
        %s203 = ssub.s32 %s17, 1
      $region12: #{ecg_text_mlp_forward.1} parent=5 // pred_fallthru
        _
      %p204 = scmp.lt.s32.totalorder %s17, 2
      // Predicated region
      $region13: #{ecg_text_mlp_forward.1} parent=5 // pred_check
        %p205 = pneg %p204
      $region14: #{ecg_text_mlp_forward.1} parent=5 // pred_check_branch
        %207 = sbr.rel (%p205) target = $region16
      $region15: #{ecg_text_mlp_forward.1} parent=5 // pred_region
        // Predicated region
        $region17: #{ecg_text_mlp_forward.1} parent=15 // pred_check
          %p208 = pneg %p51
        $region18: #{ecg_text_mlp_forward.1} parent=15 // pred_check_branch
          %210 = sbr.rel (%p208) target = $region20
        $region19: #{ecg_text_mlp_forward.1} parent=15 // pred_region
          %p211 = scmp.lt.s32.totalorder %s24, 1
          %s212 = scalar_select %p211, %s24, 1
          %p213 = scmp.lt.s32.totalorder %s25, 0
          %s214 = scalar_select %p213, %s25, 0
          %s215 = sadd.s32 %s214, %s212
          %s216 = scalar_lea.vmem %s0, %s215
        $region20: #{ecg_text_mlp_forward.1} parent=15 // pred_fallthru
          _
        // Predicated region
        $region21: #{ecg_text_mlp_forward.1} parent=15 // pred_check
          %p217 = pneg %p77
        $region22: #{ecg_text_mlp_forward.1} parent=15 // pred_check_branch
          %219 = sbr.rel (%p217) target = $region24
        $region23: #{ecg_text_mlp_forward.1} parent=15 // pred_region
          %s220 = sand.u32 %s67, 1
          %s221 = scalar_lea.sflag [#allocation3], %s220
          %s222 = sand.u32 %s67, 1
          %s223 = smul.addr %s222, 64
          %s224 = scalar_lea.vmem [#allocation2], %s223
          %s226 = ssub.s32 1024, 1024
          %227 = vsyncadd %s221, %s226
          %s228 = smul.addr %s24, 16
          %s229 = smul.addr %s228, 64
          %s230 = scalar_lea.hbm %s1, %s229
          %s231 = sshll.u32 %s224, 4
          %s232 = int_to_ptr.vmem [resolvable:$true] %s231
          %237 = dma.hbm_to_vmem [thread:$0]  %s230, 1024, %s232, %s221, 64, 64, 4
        $region24: #{ecg_text_mlp_forward.1} parent=15 // pred_fallthru
          _
        // Predicated region
        $region25: #{ecg_text_mlp_forward.1} parent=15 // pred_check
          %p238 = pneg %p103
        $region26: #{ecg_text_mlp_forward.1} parent=15 // pred_check_branch
          %240 = sbr.rel (%p238) target = $region28
        $region27: #{ecg_text_mlp_forward.1} parent=15 // pred_region
          %p241 = scmp.lt.s32.totalorder %s24, 1
          %s242 = scalar_select %p241, %s24, 1
          %s243 = scalar_lea.vmem %s2, %s242
        $region28: #{ecg_text_mlp_forward.1} parent=15 // pred_fallthru
          _
        // Predicated region
        $region29: #{ecg_text_mlp_forward.1} parent=15 // pred_check
          %p244 = pneg %p129
        $region30: #{ecg_text_mlp_forward.1} parent=15 // pred_check_branch
          %246 = sbr.rel (%p244) target = $region32
        $region31: #{ecg_text_mlp_forward.1} parent=15 // pred_region
          %s247 = sand.u32 %s119, 1
          %s248 = scalar_lea.sflag [#allocation5], %s247
          %s249 = sand.u32 %s119, 1
          %s250 = smul.addr %s249, 64
          %s251 = scalar_lea.vmem [#allocation4], %s250
          %s253 = ssub.s32 1024, 1024
          %254 = vsyncadd %s248, %s253
          %s255 = smul.addr %s24, 16
          %s256 = smul.addr %s255, 64
          %s257 = scalar_lea.hbm %s3, %s256
          %s258 = sshll.u32 %s251, 4
          %s259 = int_to_ptr.vmem [resolvable:$true] %s258
          %264 = dma.hbm_to_vmem [thread:$0]  %s257, 1024, %s259, %s248, 64, 64, 4
        $region32: #{ecg_text_mlp_forward.1} parent=15 // pred_fallthru
          _
        // Predicated region
        $region33: #{ecg_text_mlp_forward.1} parent=15 // pred_check
          %p265 = pneg %p155
        $region34: #{ecg_text_mlp_forward.1} parent=15 // pred_check_branch
          %267 = sbr.rel (%p265) target = $region36
        $region35: #{ecg_text_mlp_forward.1} parent=15 // pred_region
          %p268 = scmp.lt.s32.totalorder %s24, 1
          %s269 = scalar_select %p268, %s24, 1
          %s270 = scalar_lea.vmem %s4, %s269
        $region36: #{ecg_text_mlp_forward.1} parent=15 // pred_fallthru
          _
      $region16: #{ecg_text_mlp_forward.1} parent=5 // pred_fallthru
        _
      %p271 = scmp.le.s32.totalorder 1, %s17
      %p272 = scmp.lt.s32.totalorder %s17, 3
      %p273 = pnand %p271, %p272
      %p274 = pneg %p273
      // Predicated region
      $region37: #{ecg_text_mlp_forward.1} parent=5 // pred_check
        _
      $region38: #{ecg_text_mlp_forward.1} parent=5 // pred_check_branch
        %276 = sbr.rel (%p273) target = $region40
      $region39: #{ecg_text_mlp_forward.1} parent=5 // pred_region
        %s277 = ssub.s32 %s17, 1
        %s278 = sand.u32 %s70, 1
        %s279 = scalar_lea.sflag [#allocation3], %s278
        %s280 = sand.u32 %s70, 1
        %s281 = smul.addr %s280, 64
        %s282 = scalar_lea.vmem [#allocation2], %s281
        // Predicated region
        $region41: #{ecg_text_mlp_forward.1} parent=39 // pred_check
          %p283 = pneg %p83
        $region42: #{ecg_text_mlp_forward.1} parent=39 // pred_check_branch
          %285 = sbr.rel (%p283) target = $region44
        $region43: #{ecg_text_mlp_forward.1} parent=39 // pred_region
          %286 = dma.done %s279, 1024
        $region44: #{ecg_text_mlp_forward.1} parent=39 // pred_fallthru
          _
        %s287 = sand.u32 %s122, 1
        %s288 = scalar_lea.sflag [#allocation5], %s287
        %s289 = sand.u32 %s122, 1
        %s290 = smul.addr %s289, 64
        %s291 = scalar_lea.vmem [#allocation4], %s290
        // Predicated region
        $region45: #{ecg_text_mlp_forward.1} parent=39 // pred_check
          %p292 = pneg %p135
        $region46: #{ecg_text_mlp_forward.1} parent=39 // pred_check_branch
          %294 = sbr.rel (%p292) target = $region48
        $region47: #{ecg_text_mlp_forward.1} parent=39 // pred_region
          %295 = dma.done %s288, 1024
        $region48: #{ecg_text_mlp_forward.1} parent=39 // pred_fallthru
          _
        %p296 = scmp.lt.s32.totalorder %s26, 1
        %s297 = scalar_select %p296, %s26, 1
        %p298 = scmp.lt.s32.totalorder %s27, 0
        %s299 = scalar_select %p298, %s27, 0
        %s300 = sadd.s32 %s299, %s297
        %s301 = scalar_lea.vmem %s0, %s300
        %p302 = pneg %p57
        %p303 = pneg %p54
        %s304 = sand.u32 %s70, 1
        %s305 = scalar_lea.sflag [#allocation3], %s304
        %s306 = sand.u32 %s70, 1
        %s307 = smul.addr %s306, 64
        %s308 = scalar_lea.vmem [#allocation2], %s307
        %p309 = pneg %p83
        %p310 = pneg %p80
        %p311 = scmp.lt.s32.totalorder %s26, 1
        %s312 = scalar_select %p311, %s26, 1
        %s313 = scalar_lea.vmem %s2, %s312
        %p314 = pneg %p109
        %p315 = pneg %p106
        %s316 = sand.u32 %s122, 1
        %s317 = scalar_lea.sflag [#allocation5], %s316
        %s318 = sand.u32 %s122, 1
        %s319 = smul.addr %s318, 64
        %s320 = scalar_lea.vmem [#allocation4], %s319
        %p321 = pneg %p135
        %p322 = pneg %p132
        %p323 = scmp.lt.s32.totalorder %s26, 1
        %s324 = scalar_select %p323, %s26, 1
        %s325 = scalar_lea.vmem %s4, %s324
        %p326 = pneg %p161
        %p327 = pneg %p158
        %p328 = pneg %p189
        %p329 = pneg %p186
        %p330 = scmp.lt.s32.totalorder %s26, 1
        %s331 = scalar_select %p330, %s26, 1
        %p332 = scmp.lt.s32.totalorder %s27, 0
        %s333 = scalar_select %p332, %s27, 0
        %s334 = sadd.s32 %s333, %s331
        %s335 = smul.addr %s334, 2
        %s336 = scalar_lea.vmem %s5, %s335
        %p337 = scmp.lt.s32.totalorder %s26, 1
        %s338 = scalar_select %p337, %s26, 1
        %p339 = scmp.lt.s32.totalorder %s27, 0
        %s340 = scalar_select %p339, %s27, 0
        %s341 = sadd.s32 %s340, %s338
        %s342 = scalar_lea.vmem %s0, %s341
        %p343 = scmp.lt.s32.totalorder %s26, 1
        %s344 = scalar_select %p343, %s26, 1
        %s345 = scalar_lea.vmem %s2, %s344
        %p346 = scmp.lt.s32.totalorder %s26, 1
        %s347 = scalar_select %p346, %s26, 1
        %s348 = scalar_lea.vmem %s4, %s347
        %p349 = scmp.lt.s32.totalorder %s26, 1
        %s350 = scalar_select %p349, %s26, 1
        %p351 = scmp.lt.s32.totalorder %s27, 0
        %s352 = scalar_select %p351, %s27, 0
        %s353 = sadd.s32 %s352, %s350
        %s354 = smul.addr %s353, 2
        %s355 = scalar_lea.vmem %s5, %s354
        %v357 = vld [vmem:[%s342] sm:$0x1]
        %v358 = vld [vmem:[%s282] sm:$0xf]
        %v359 = vld [vmem:[%s282 + $0x4] sm:$0xf]
        %v360 = vld [vmem:[%s282 + $0x8] sm:$0xf]
        %v361 = vld [vmem:[%s282 + $0xc] sm:$0xf]
        %v362 = vld [vmem:[%s282 + $0x10] sm:$0xf]
        %v363 = vld [vmem:[%s282 + $0x14] sm:$0xf]
        %v364 = vld [vmem:[%s282 + $0x18] sm:$0xf]
        %v365 = vld [vmem:[%s282 + $0x1c] sm:$0xf]
        %v366 = vld [vmem:[%s282 + $0x20] sm:$0xf]
        %v367 = vld [vmem:[%s282 + $0x24] sm:$0xf]
        %v368 = vld [vmem:[%s282 + $0x28] sm:$0xf]
        %v369 = vld [vmem:[%s282 + $0x2c] sm:$0xf]
        %v370 = vld [vmem:[%s282 + $0x30] sm:$0xf]
        %v371 = vld [vmem:[%s282 + $0x34] sm:$0xf]
        %v372 = vld [vmem:[%s282 + $0x38] sm:$0xf]
        %v373 = vld [vmem:[%s282 + $0x3c] sm:$0xf]
        %v374 = vld [vmem:[%s345] sm:$0x1]
        %v376 = vlaneseq
        %v377 = vshrl.u32 %v376, 7
        %v378 = vsub.s32 0, %v377
        %v379 = vrot.slane %v374, %v378
        %v397 = vunpack.c.l.b16 %v358
        %v398 = vunpack.c.l.b16 %v359
        %v399 = vunpack.c.l.b16 %v360
        %v400 = vunpack.c.l.b16 %v361
        %v401 = vunpack.c.l.b16 %v362
        %v402 = vunpack.c.l.b16 %v363
        %v403 = vunpack.c.l.b16 %v364
        %v404 = vunpack.c.l.b16 %v365
        %v405 = vunpack.c.l.b16 %v366
        %v406 = vunpack.c.l.b16 %v367
        %v407 = vunpack.c.l.b16 %v368
        %v408 = vunpack.c.l.b16 %v369
        %v409 = vunpack.c.l.b16 %v370
        %v410 = vunpack.c.l.b16 %v371
        %v411 = vunpack.c.l.b16 %v372
        %v412 = vunpack.c.l.b16 %v373
        %v413 = vpack.c.b16 %v398, %v397
        %v414 = vpack.c.b16 %v400, %v399
        %v415 = vpack.c.b16 %v402, %v401
        %v416 = vpack.c.b16 %v404, %v403
        %v417 = vpack.c.b16 %v406, %v405
        %v418 = vpack.c.b16 %v408, %v407
        %v419 = vpack.c.b16 %v410, %v409
        %v420 = vpack.c.b16 %v412, %v411
        %429 = vmatprep.subr.bf16.mxu0 0
        %430 = vmatpush1.bf16.msra.mxu0 %v413
        %431 = vmatprep.subr.bf16.mxu0 0
        %432 = vmatpush1.bf16.msra.mxu0 %v414
        %433 = vmatprep.subr.bf16.mxu0 0
        %434 = vmatpush1.bf16.msra.mxu0 %v415
        %435 = vmatprep.subr.bf16.mxu0 0
        %436 = vmatpush1.bf16.msra.mxu0 %v416
        %437 = vmatprep.subr.bf16.mxu0 0
        %438 = vmatpush1.bf16.msra.mxu0 %v417
        %439 = vmatprep.subr.bf16.mxu0 0
        %440 = vmatpush1.bf16.msra.mxu0 %v418
        %441 = vmatprep.subr.bf16.mxu0 0
        %442 = vmatpush1.bf16.msra.mxu0 %v419
        %443 = vmatprep.subr.bf16.mxu0 0
        %444 = vmatpush1.bf16.msra.mxu0 %v420
        %445 = vmatprep.subr.bf16.mxu0 0
        %446 = vmatpush1.bf16.msra.mxu0 0
        %447 = vmatprep.subr.bf16.mxu0 0
        %448 = vmatpush1.bf16.msra.mxu0 0
        %449 = vmatprep.subr.bf16.mxu0 0
        %450 = vmatpush1.bf16.msra.mxu0 0
        %451 = vmatprep.subr.bf16.mxu0 0
        %452 = vmatpush1.bf16.msra.mxu0 0
        %453 = vmatprep.subr.bf16.mxu0 0
        %454 = vmatpush1.bf16.msra.mxu0 0
        %455 = vmatprep.subr.bf16.mxu0 0
        %456 = vmatpush1.bf16.msra.mxu0 0
        %457 = vmatprep.subr.bf16.mxu0 0
        %458 = vmatpush1.bf16.msra.mxu0 0
        %459 = vmatprep.subr.bf16.mxu0 0
        %460 = vmatpush1.bf16.msra.mxu0 0
        %461 = vmatprep.mubr.bf16.mxu0 0
        %462 = vmatmul.mubr.bf16.gmra.mrb[0].mxu0 %v357
        %v463 = vpop.f32.mrb[0].mxu0
        %v464 = vadd.f32 %v379, %v463
        %v465 = vpop.f32.mrb[0].mxu0
        %v466 = vpop.f32.mrb[0].mxu0
        %v467 = vpop.f32.mrb[0].mxu0
        %468 = vdwg.mxu0
        %v469 = vmax.f32 %v464, 0.0
        %v470 = vpack.c.bf16 %v469, %v469
        %v471 = vld [vmem:[%s291] sm:$0xf]
        %v472 = vld [vmem:[%s291 + $0x4] sm:$0xf]
        %v473 = vld [vmem:[%s291 + $0x8] sm:$0xf]
        %v474 = vld [vmem:[%s291 + $0xc] sm:$0xf]
        %v475 = vld [vmem:[%s291 + $0x10] sm:$0xf]
        %v476 = vld [vmem:[%s291 + $0x14] sm:$0xf]
        %v477 = vld [vmem:[%s291 + $0x18] sm:$0xf]
        %v478 = vld [vmem:[%s291 + $0x1c] sm:$0xf]
        %v479 = vld [vmem:[%s291 + $0x20] sm:$0xf]
        %v480 = vld [vmem:[%s291 + $0x24] sm:$0xf]
        %v481 = vld [vmem:[%s291 + $0x28] sm:$0xf]
        %v482 = vld [vmem:[%s291 + $0x2c] sm:$0xf]
        %v483 = vld [vmem:[%s291 + $0x30] sm:$0xf]
        %v484 = vld [vmem:[%s291 + $0x34] sm:$0xf]
        %v485 = vld [vmem:[%s291 + $0x38] sm:$0xf]
        %v486 = vld [vmem:[%s291 + $0x3c] sm:$0xf]
        %v487 = vld [vmem:[%s348] sm:$0x1]
        %v489 = vlaneseq
        %v490 = vshrl.u32 %v489, 7
        %v491 = vsub.s32 0, %v490
        %v492 = vrot.slane %v487, %v491
        %v510 = vunpack.c.l.b16 %v471
        %v511 = vunpack.c.l.b16 %v472
        %v512 = vunpack.c.l.b16 %v473
        %v513 = vunpack.c.l.b16 %v474
        %v514 = vunpack.c.l.b16 %v475
        %v515 = vunpack.c.l.b16 %v476
        %v516 = vunpack.c.l.b16 %v477
        %v517 = vunpack.c.l.b16 %v478
        %v518 = vunpack.c.l.b16 %v479
        %v519 = vunpack.c.l.b16 %v480
        %v520 = vunpack.c.l.b16 %v481
        %v521 = vunpack.c.l.b16 %v482
        %v522 = vunpack.c.l.b16 %v483
        %v523 = vunpack.c.l.b16 %v484
        %v524 = vunpack.c.l.b16 %v485
        %v525 = vunpack.c.l.b16 %v486
        %v526 = vpack.c.b16 %v511, %v510
        %v527 = vpack.c.b16 %v513, %v512
        %v528 = vpack.c.b16 %v515, %v514
        %v529 = vpack.c.b16 %v517, %v516
        %v530 = vpack.c.b16 %v519, %v518
        %v531 = vpack.c.b16 %v521, %v520
        %v532 = vpack.c.b16 %v523, %v522
        %v533 = vpack.c.b16 %v525, %v524
        %542 = vmatprep.subr.bf16.mxu0 0
        %543 = vmatpush1.bf16.msra.mxu0 %v526
        %544 = vmatprep.subr.bf16.mxu0 0
        %545 = vmatpush1.bf16.msra.mxu0 %v527
        %546 = vmatprep.subr.bf16.mxu0 0
        %547 = vmatpush1.bf16.msra.mxu0 %v528
        %548 = vmatprep.subr.bf16.mxu0 0
        %549 = vmatpush1.bf16.msra.mxu0 %v529
        %550 = vmatprep.subr.bf16.mxu0 0
        %551 = vmatpush1.bf16.msra.mxu0 %v530
        %552 = vmatprep.subr.bf16.mxu0 0
        %553 = vmatpush1.bf16.msra.mxu0 %v531
        %554 = vmatprep.subr.bf16.mxu0 0
        %555 = vmatpush1.bf16.msra.mxu0 %v532
        %556 = vmatprep.subr.bf16.mxu0 0
        %557 = vmatpush1.bf16.msra.mxu0 %v533
        %558 = vmatprep.subr.bf16.mxu0 0
        %559 = vmatpush1.bf16.msra.mxu0 0
        %560 = vmatprep.subr.bf16.mxu0 0
        %561 = vmatpush1.bf16.msra.mxu0 0
        %562 = vmatprep.subr.bf16.mxu0 0
        %563 = vmatpush1.bf16.msra.mxu0 0
        %564 = vmatprep.subr.bf16.mxu0 0
        %565 = vmatpush1.bf16.msra.mxu0 0
        %566 = vmatprep.subr.bf16.mxu0 0
        %567 = vmatpush1.bf16.msra.mxu0 0
        %568 = vmatprep.subr.bf16.mxu0 0
        %569 = vmatpush1.bf16.msra.mxu0 0
        %570 = vmatprep.subr.bf16.mxu0 0
        %571 = vmatpush1.bf16.msra.mxu0 0
        %572 = vmatprep.subr.bf16.mxu0 0
        %573 = vmatpush1.bf16.msra.mxu0 0
        %574 = vmatprep.mubr.bf16.mxu0 0
        %575 = vmatmul.mubr.bf16.gmra.mrb[0].mxu0 %v470
        %v576 = vpop.f32.mrb[0].mxu0
        %v577 = vadd.f32 %v492, %v576
        %v578 = vpop.f32.mrb[0].mxu0
        %v579 = vpop.f32.mrb[0].mxu0
        %v580 = vpop.f32.mrb[0].mxu0
        %581 = vdwg.mxu0
        %582 = vst [vmem:[%s355] sm:$0x3] %v577
        %p583 = scmp.lt.s32.totalorder %s26, 1
        %s584 = scalar_select %p583, %s26, 1
        %p585 = scmp.lt.s32.totalorder %s27, 0
        %s586 = scalar_select %p585, %s27, 0
        %s587 = sadd.s32 %s586, %s584
        %s588 = smul.addr %s587, 2
        %s589 = scalar_lea.vmem %s5, %s588
        // Predicated region
        $region49: #{ecg_text_mlp_forward.1} parent=39 // pred_check
          %p590 = pneg %p186
        $region50: #{ecg_text_mlp_forward.1} parent=39 // pred_check_branch
          %592 = sbr.rel (%p590) target = $region52
        $region51: #{ecg_text_mlp_forward.1} parent=39 // pred_region
          _
        $region52: #{ecg_text_mlp_forward.1} parent=39 // pred_fallthru
          _
      $region40: #{ecg_text_mlp_forward.1} parent=5 // pred_fallthru
        _
      %p593 = scmp.le.s32.totalorder 2, %s17
      // Predicated region
      $region53: #{ecg_text_mlp_forward.1} parent=5 // pred_check
        %p594 = pneg %p593
      $region54: #{ecg_text_mlp_forward.1} parent=5 // pred_check_branch
        %596 = sbr.rel (%p594) target = $region56
      $region55: #{ecg_text_mlp_forward.1} parent=5 // pred_region
        %s597 = ssub.s32 %s17, 2
        // Predicated region
        $region57: #{ecg_text_mlp_forward.1} parent=55 // pred_check
          %p598 = pneg %p192
        $region58: #{ecg_text_mlp_forward.1} parent=55 // pred_check_branch
          %600 = sbr.rel (%p598) target = $region60
        $region59: #{ecg_text_mlp_forward.1} parent=55 // pred_region
          %p601 = scmp.lt.s32.totalorder %s28, 1
          %s602 = scalar_select %p601, %s28, 1
          %p603 = scmp.lt.s32.totalorder %s29, 0
          %s604 = scalar_select %p603, %s29, 0
          %s605 = sadd.s32 %s604, %s602
          %s606 = smul.addr %s605, 2
          %s607 = scalar_lea.vmem %s5, %s606
        $region60: #{ecg_text_mlp_forward.1} parent=55 // pred_fallthru
          _
      $region56: #{ecg_text_mlp_forward.1} parent=5 // pred_fallthru
        _
    $region6: #{ecg_text_mlp_forward.1} parent=1 // loop_footer
      %s21 = sadd.s32 1, %s17
    $region7: #{ecg_text_mlp_forward.1} parent=1 // loop_footer_branch
      %16 = sbr.rel target = $region3
    $region8: #{ecg_text_mlp_forward.1} parent=1 // loop_exit
      _
    %608 = vsyncpa [#allocation3], 1
    %s609 = scalar_lea.sflag [#allocation3], 1
    %610 = vsyncpa %s609, 1
    %611 = vsyncpa [#allocation5], 1
    %s612 = scalar_lea.sflag [#allocation5], 1
    %613 = vsyncpa %s612, 1

</llo_original>
